<compile_context>
chip_gen: v7x
topology: tpu7x:2x2x1
jax: 0.10.0
libtpu: 0.0.40
codegen_flags: <defaults>
</compile_context>

<pallas_src>
import jax
import jax.numpy as jnp
from jax.experimental import pallas as pl
from jax.experimental.pallas import tpu as pltpu

_LANE = 128
_SUBLANE = 8
_MIB = 1024 * 1024


def _round_up(x, m):
    return (x + m - 1) // m * m


# --------------------------- in-kernel exact GELU ---------------------------- #
def _gelu_exact(x):
    """Exact (erf-based) GELU matching PyTorch nn.GELU() default.

    erf via Abramowitz & Stegun 7.1.26 (|err| < 1.5e-7), using only
    mul/add/exp/where; the divide is pushed to the EUP with approx reciprocal
    so it stays off the VALU slots.
    """
    z = x * 0.7071067811865476                     # x / sqrt(2)
    a = jnp.abs(z)
    t = pl.reciprocal(1.0 + 0.3275911 * a, approx=True)   # EUP slot, not VALU divide
    poly = t * (0.254829592
                + t * (-0.284496736
                       + t * (1.421413741
                              + t * (-1.453152027
                                     + t * 1.061405429))))
    erf_abs = 1.0 - poly * jnp.exp(-a * a)
    erf_z = jnp.where(z >= 0, erf_abs, -erf_abs)
    return 0.5 * x * (1.0 + erf_z)


# ------------------------------- Pallas kernel ------------------------------- #
def _mlp_kernel(x_ref, w1_ref, b1_ref, w2_ref, b2_ref, o_ref):
    """One row-tile of tokens per grid step; feature dims stay whole on the lane axis.

    x_ref : (TM, D_in_p)      f32 token tile
    w1_ref: (D_in_p, D_hid_p) bf16, VMEM-resident across the grid
    b1_ref: (1, D_hid_p)      f32
    w2_ref: (D_hid_p, D_out_p) bf16, VMEM-resident across the grid
    b2_ref: (1, D_out_p)      f32
    o_ref : (TM, D_out_p)     f32
    """
    x = x_ref[...].astype(jnp.bfloat16)            # bf16 MXU operands,
    h = jnp.dot(x, w1_ref[...], preferred_element_type=jnp.float32)  # f32 accumulate
    h = _gelu_exact(h + b1_ref[...])               # nn.GELU(); Dropout(p=0) = identity
    y = jnp.dot(h.astype(jnp.bfloat16), w2_ref[...],
                preferred_element_type=jnp.float32) + b2_ref[...]
    o_ref[...] = y.astype(o_ref.dtype)             # Dropout(p=0) = identity


# --------------------------- tiling / VMEM planning --------------------------- #
def _tpu_vmem_info():
    """Returns (per-core VMEM bytes, looks-like-dual-core-v7x). Conservative fallback."""
    try:
        info = pltpu.get_tpu_info()
        vmem = int(getattr(info, "vmem_capacity_bytes", 0))
        if vmem > 0:
            return vmem, vmem <= 64 * _MIB          # v7x: 64 MiB/TC, 2 TCs
    except Exception:
        pass
    return 64 * _MIB, False                         # unknown: assume tightest budget


def _vmem_estimate(tm, d_in_p, d_hid_p, d_out_p, single_buffer_weights=True):
    wbuf = 1 if single_buffer_weights else 2
    weights = wbuf * ((d_in_p * d_hid_p + d_hid_p * d_out_p) * 2   # bf16 weights
                      + (d_hid_p + d_out_p) * 4)                   # f32 biases
    tiles = 2 * tm * (d_in_p + d_out_p) * 4        # double-buffered x / out tiles (f32)
    live = tm * (d_in_p * 2 + d_hid_p * 6 + d_out_p * 4)   # in-kernel temporaries
    return weights + tiles + live


def _pick_row_tile(m, d_in_p, d_hid_p, d_out_p, vmem_cap, dual_core):
    budget = int(0.7 * vmem_cap)
    tm_cap = 256 if vmem_cap <= 64 * _MIB else 1024     # v7x vs v5e/v6e headroom
    m8 = _round_up(m, _SUBLANE)
    tm = _SUBLANE
    for cand in (1024, 512, 256, 128, 64, 32, 16, 8):
        if cand > tm_cap:
            continue
        if _vmem_estimate(cand, d_in_p, d_hid_p, d_out_p) <= budget:
            tm = cand
            break
    if m8 <= tm:
        return m8, m8                                   # single block covers all rows
    n_blocks = -(-m // tm)                              # cdiv
    if dual_core and n_blocks % 2 == 1:
        n_blocks += 1                                   # balanced halves across 2 TCs
    return tm, n_blocks * tm


# --------------------------------- wrapper ------------------------------------ #
def mlp_pallas(x2d, w1, b1, w2, b2):
    """x2d: (M, D_in) f32; w1: (D_in, D_hid); b1: (1, D_hid); w2: (D_hid, D_out); b2: (1, D_out)."""
    m, d_in = x2d.shape
    d_hid = w1.shape[1]
    d_out = w2.shape[1]

    # Lane-dense padding of all feature dims to multiples of 128.
    d_in_p, d_hid_p, d_out_p = (_round_up(d, _LANE) for d in (d_in, d_hid, d_out))

    vmem_cap, dual_core = _tpu_vmem_info()
    tm, m_pad = _pick_row_tile(m, d_in_p, d_hid_p, d_out_p, vmem_cap, dual_core)
    n_blocks = m_pad // tm

    # Zero padding keeps semantics exact: padded hidden lanes get bias 0 -> GELU(0)=0,
    # and the matching (zero) rows of w2 contribute nothing; padded rows/cols are sliced off.
    x_p = jnp.pad(x2d, ((0, m_pad - m), (0, d_in_p - d_in)))
    w1_p = jnp.pad(w1, ((0, d_in_p - d_in), (0, d_hid_p - d_hid))).astype(jnp.bfloat16)
    b1_p = jnp.pad(b1, ((0, 0), (0, d_hid_p - d_hid)))
    w2_p = jnp.pad(w2, ((0, d_hid_p - d_hid), (0, d_out_p - d_out))).astype(jnp.bfloat16)
    b2_p = jnp.pad(b2, ((0, 0), (0, d_out_p - d_out)))

    vmem_need = _vmem_estimate(tm, d_in_p, d_hid_p, d_out_p)
    vmem_limit = int(min(max(2 * vmem_need, 32 * _MIB), 0.9 * vmem_cap))
    cparams = pltpu.CompilerParams(
        dimension_semantics=("parallel",),
        vmem_limit_bytes=vmem_limit,
    )

    def build(single_buffer_weights):
        if single_buffer_weights:
            def wspec(shape):
                return pl.BlockSpec(shape, lambda i: (0, 0),
                                    pipeline_mode=pl.Buffered(1))
        else:
            def wspec(shape):
                return pl.BlockSpec(shape, lambda i: (0, 0))
        return pl.pallas_call(
            _mlp_kernel,
            out_shape=jax.ShapeDtypeStruct((m_pad, d_out_p), x2d.dtype),
            grid=(n_blocks,),
            in_specs=[
                pl.BlockSpec((tm, d_in_p), lambda i: (i, 0)),
                wspec((d_in_p, d_hid_p)),      # resident fc1 weight (bf16)
                wspec((1, d_hid_p)),           # fc1 bias
                wspec((d_hid_p, d_out_p)),     # resident fc2 weight (bf16)
                wspec((1, d_out_p)),           # fc2 bias
            ],
            out_specs=pl.BlockSpec((tm, d_out_p), lambda i: (i, 0)),
            compiler_params=cparams,
        )

    try:
        y_p = build(True)(x_p, w1_p, b1_p, w2_p, b2_p)
    except Exception:
        # TODO(synk): pl.Buffered(1) single-buffering rejected by this jax/Mosaic
        # version; fall back to default double-buffered constant-index weights.
        y_p = build(False)(x_p, w1_p, b1_p, w2_p, b2_p)

    return y_p[:m, :d_out]


# --------------------------- parameter init (deterministic) ------------------ #
def init_mlp_params(key, in_features, hidden_features=None, out_features=None):
    """PyTorch nn.Linear default init; weights stored pre-transposed as (in, out)."""
    hidden_features = hidden_features or in_features
    out_features = out_features or in_features
    k1, k2, k3, k4 = jax.random.split(key, 4)

    def linear(kw, kb, fan_in, fan_out):
        bound = 1.0 / jnp.sqrt(jnp.float32(fan_in))
        w = jax.random.uniform(kw, (fan_in, fan_out), jnp.float32, -bound, bound)
        b = jax.random.uniform(kb, (fan_out,), jnp.float32, -bound, bound)
        return w, b.reshape(1, -1)

    w1, b1 = linear(k1, k2, in_features, hidden_features)
    w2, b2 = linear(k3, k4, hidden_features, out_features)
    return {"w1": w1, "b1": b1, "w2": w2, "b2": b2}


# ------------------------------- forward ------------------------------------- #
def mlp_forward(x, params):
    """x: (..., in_features) -> (..., out_features). Dropout(0.0)/eval = identity."""
    d_in = params["w1"].shape[0]
    d_out = params["w2"].shape[1]
    x2d = x.reshape(-1, d_in)
    y2d = mlp_pallas(x2d, params["w1"], params["b1"], params["w2"], params["b2"])
    return y2d.reshape(*x.shape[:-1], d_out)


# -------------------------- pure-JAX reference (check) ----------------------- #
def mlp_reference_bf16(x, params):
    """Reference matched to the kernel's bf16-operand / f32-accumulate matmuls."""
    w1, b1, w2, b2 = params["w1"], params["b1"], params["w2"], params["b2"]
    h = jnp.dot(x.astype(jnp.bfloat16), w1.astype(jnp.bfloat16),
                preferred_element_type=jnp.float32) + b1[0]
    h = jax.nn.gelu(h, approximate=False)
    y = jnp.dot(h.astype(jnp.bfloat16), w2.astype(jnp.bfloat16),
                preferred_element_type=jnp.float32) + b2[0]
    return y


if __name__ == "__main__":
    key = jax.random.PRNGKey(0)
    k_x, k_p = jax.random.split(key)

    B, S, D_IN, D_HID = 2, 16, 32, 64        # out_features defaults to in_features
    x = jax.random.normal(k_x, (B, S, D_IN), jnp.float32)
    params = init_mlp_params(k_p, D_IN, D_HID)

    out = jax.block_until_ready(mlp_forward(x, params))
    assert out.shape == (B, S, D_IN), out.shape

    ref = mlp_reference_bf16(x, params)
    max_diff = float(jnp.max(jnp.abs(out - ref)))
    # bf16-matched reference: residual diff is only the erf-polynomial / approx-
    # reciprocal GELU (few e-3); real layout/transpose bugs would be O(1).
    assert jnp.allclose(out, ref, atol=3e-2, rtol=3e-2), f"max abs diff {max_diff}"

    print("KERNEL_OK")
</pallas_src>

<mosaic_0001>
module attributes {stable_mosaic.version = 11 : i64} {
  func.func @_mlp_kernel(%arg0: i32, %arg1: memref<32x128xf32, #tpu.memory_space<vmem>>, %arg2: memref<128x128xbf16, #tpu.memory_space<vmem>>, %arg3: memref<1x128xf32, #tpu.memory_space<vmem>>, %arg4: memref<128x128xbf16, #tpu.memory_space<vmem>>, %arg5: memref<1x128xf32, #tpu.memory_space<vmem>>, %arg6: memref<32x128xf32, #tpu.memory_space<vmem>>) attributes {dimension_semantics = [#tpu.dimension_semantics<parallel>], iteration_bounds = array<i64: 1>, scalar_prefetch = 0 : i64, scratch_operands = 0 : i64, tpu.core_type = #tpu.core_type<tc>, window_params = [{transform_indices = @transform_0, window_bounds = array<i64: 32, 128>}, {pipeline_mode = #tpu.pipeline_mode<synchronous>, transform_indices = @transform_1, window_bounds = array<i64: 128, 128>}, {pipeline_mode = #tpu.pipeline_mode<synchronous>, transform_indices = @transform_2, window_bounds = array<i64: 1, 128>}, {pipeline_mode = #tpu.pipeline_mode<synchronous>, transform_indices = @transform_3, window_bounds = array<i64: 128, 128>}, {pipeline_mode = #tpu.pipeline_mode<synchronous>, transform_indices = @transform_4, window_bounds = array<i64: 1, 128>}, {transform_indices = @transform_5, window_bounds = array<i64: 32, 128>}]} {
    %c0 = arith.constant 0 : index
    %c0_0 = arith.constant 0 : index
    %0 = vector.load %arg1[%c0, %c0_0] : memref<32x128xf32, #tpu.memory_space<vmem>>, vector<32x128xf32>
    %1 = arith.truncf %0 : vector<32x128xf32> to vector<32x128xbf16>
    %c0_1 = arith.constant 0 : index
    %c0_2 = arith.constant 0 : index
    %2 = vector.load %arg2[%c0_1, %c0_2] : memref<128x128xbf16, #tpu.memory_space<vmem>>, vector<128x128xbf16>
    %cst = arith.constant dense<0.000000e+00> : vector<32x128xf32>
    %3 = tpu.matmul %1, %2, %cst {dimension_numbers = #tpu.dot_dimension_numbers<[1], [0], [0], [1], [0, 0, 1, 1], [], []>} : vector<32x128xbf16>, vector<128x128xbf16>, vector<32x128xf32> -> vector<32x128xf32>
    %c0_3 = arith.constant 0 : index
    %c0_4 = arith.constant 0 : index
    %4 = vector.load %arg3[%c0_3, %c0_4] : memref<1x128xf32, #tpu.memory_space<vmem>>, vector<1x128xf32>
    %5 = vector.broadcast %4 : vector<1x128xf32> to vector<32x128xf32>
    %6 = arith.addf %3, %5 : vector<32x128xf32>
    %cst_5 = arith.constant 0.707106769 : f32
    %7 = vector.broadcast %cst_5 : f32 to vector<32x128xf32>
    %8 = arith.mulf %6, %7 : vector<32x128xf32>
    %9 = math.absf %8 : vector<32x128xf32>
    %cst_6 = arith.constant 0.327591091 : f32
    %10 = vector.broadcast %cst_6 : f32 to vector<32x128xf32>
    %11 = arith.mulf %10, %9 : vector<32x128xf32>
    %cst_7 = arith.constant 1.000000e+00 : f32
    %12 = vector.broadcast %cst_7 : f32 to vector<32x128xf32>
    %13 = arith.addf %12, %11 : vector<32x128xf32>
    %14 = tpu.reciprocal %13 {approx = true} : vector<32x128xf32> -> vector<32x128xf32>
    %cst_8 = arith.constant 1.06140542 : f32
    %15 = vector.broadcast %cst_8 : f32 to vector<32x128xf32>
    %16 = arith.mulf %14, %15 : vector<32x128xf32>
    %cst_9 = arith.constant -1.45315206 : f32
    %17 = vector.broadcast %cst_9 : f32 to vector<32x128xf32>
    %18 = arith.addf %17, %16 : vector<32x128xf32>
    %19 = arith.mulf %14, %18 : vector<32x128xf32>
    %cst_10 = arith.constant 1.42141378 : f32
    %20 = vector.broadcast %cst_10 : f32 to vector<32x128xf32>
    %21 = arith.addf %20, %19 : vector<32x128xf32>
    %22 = arith.mulf %14, %21 : vector<32x128xf32>
    %cst_11 = arith.constant -0.284496725 : f32
    %23 = vector.broadcast %cst_11 : f32 to vector<32x128xf32>
    %24 = arith.addf %23, %22 : vector<32x128xf32>
    %25 = arith.mulf %14, %24 : vector<32x128xf32>
    %cst_12 = arith.constant 0.254829586 : f32
    %26 = vector.broadcast %cst_12 : f32 to vector<32x128xf32>
    %27 = arith.addf %26, %25 : vector<32x128xf32>
    %28 = arith.mulf %14, %27 : vector<32x128xf32>
    %cst_13 = arith.constant 0.000000e+00 : f32
    %29 = vector.broadcast %cst_13 : f32 to vector<32x128xf32>
    %30 = arith.subf %29, %9 : vector<32x128xf32>
    %31 = arith.mulf %30, %9 : vector<32x128xf32>
    %32 = math.exp %31 : vector<32x128xf32>
    %33 = arith.mulf %28, %32 : vector<32x128xf32>
    %cst_14 = arith.constant 1.000000e+00 : f32
    %34 = vector.broadcast %cst_14 : f32 to vector<32x128xf32>
    %35 = arith.subf %34, %33 : vector<32x128xf32>
    %cst_15 = arith.constant 0.000000e+00 : f32
    %36 = vector.broadcast %cst_15 : f32 to vector<32x128xf32>
    %37 = arith.cmpf oge, %8, %36 : vector<32x128xf32>
    %cst_16 = arith.constant 0.000000e+00 : f32
    %38 = vector.broadcast %cst_16 : f32 to vector<32x128xf32>
    %39 = arith.subf %38, %35 : vector<32x128xf32>
    %40 = arith.select %37, %35, %39 : vector<32x128xi1>, vector<32x128xf32>
    %cst_17 = arith.constant 5.000000e-01 : f32
    %41 = vector.broadcast %cst_17 : f32 to vector<32x128xf32>
    %42 = arith.mulf %41, %6 : vector<32x128xf32>
    %cst_18 = arith.constant 1.000000e+00 : f32
    %43 = vector.broadcast %cst_18 : f32 to vector<32x128xf32>
    %44 = arith.addf %43, %40 : vector<32x128xf32>
    %45 = arith.mulf %42, %44 : vector<32x128xf32>
    %46 = arith.truncf %45 : vector<32x128xf32> to vector<32x128xbf16>
    %c0_19 = arith.constant 0 : index
    %c0_20 = arith.constant 0 : index
    %47 = vector.load %arg4[%c0_19, %c0_20] : memref<128x128xbf16, #tpu.memory_space<vmem>>, vector<128x128xbf16>
    %cst_21 = arith.constant dense<0.000000e+00> : vector<32x128xf32>
    %48 = tpu.matmul %46, %47, %cst_21 {dimension_numbers = #tpu.dot_dimension_numbers<[1], [0], [0], [1], [0, 0, 1, 1], [], []>} : vector<32x128xbf16>, vector<128x128xbf16>, vector<32x128xf32> -> vector<32x128xf32>
    %c0_22 = arith.constant 0 : index
    %c0_23 = arith.constant 0 : index
    %49 = vector.load %arg5[%c0_22, %c0_23] : memref<1x128xf32, #tpu.memory_space<vmem>>, vector<1x128xf32>
    %50 = vector.broadcast %49 : vector<1x128xf32> to vector<32x128xf32>
    %51 = arith.addf %48, %50 : vector<32x128xf32>
    %c0_24 = arith.constant 0 : index
    %c0_25 = arith.constant 0 : index
    %52 = vector.load %arg6[%c0_24, %c0_25] : memref<32x128xf32, #tpu.memory_space<vmem>>, vector<32x128xf32>
    tpu.vector_store %arg6[%c0_24, %c0_25], %51 {strides = array<i32>} : memref<32x128xf32, #tpu.memory_space<vmem>>, vector<32x128xf32>,
    return
  }
  func.func @transform_0(%arg0: i32) -> (i32, i32) {
    %c0_i32 = arith.constant 0 : i32
    %c0_i32_0 = arith.constant 0 : i32
    return %arg0, %c0_i32 : i32, i32
  }
  func.func @transform_1(%arg0: i32) -> (i32, i32) {
    %c0_i32 = arith.constant 0 : i32
    %c0_i32_0 = arith.constant 0 : i32
    %c0_i32_1 = arith.constant 0 : i32
    return %c0_i32, %c0_i32_0 : i32, i32
  }
  func.func @transform_2(%arg0: i32) -> (i32, i32) {
    %c0_i32 = arith.constant 0 : i32
    %c0_i32_0 = arith.constant 0 : i32
    %c0_i32_1 = arith.constant 0 : i32
    return %c0_i32, %c0_i32_0 : i32, i32
  }
  func.func @transform_3(%arg0: i32) -> (i32, i32) {
    %c0_i32 = arith.constant 0 : i32
    %c0_i32_0 = arith.constant 0 : i32
    %c0_i32_1 = arith.constant 0 : i32
    return %c0_i32, %c0_i32_0 : i32, i32
  }
  func.func @transform_4(%arg0: i32) -> (i32, i32) {
    %c0_i32 = arith.constant 0 : i32
    %c0_i32_0 = arith.constant 0 : i32
    %c0_i32_1 = arith.constant 0 : i32
    return %c0_i32, %c0_i32_0 : i32, i32
  }
  func.func @transform_5(%arg0: i32) -> (i32, i32) {
    %c0_i32 = arith.constant 0 : i32
    %c0_i32_0 = arith.constant 0 : i32
    return %arg0, %c0_i32 : i32, i32
  }
}

module attributes {stable_mosaic.version = 11 : i64} {
  func.func @_mlp_kernel(%arg0: i32, %arg1: memref<32x128xf32, #tpu.memory_space<vmem>>, %arg2: memref<128x128xbf16, #tpu.memory_space<vmem>>, %arg3: memref<1x128xf32, #tpu.memory_space<vmem>>, %arg4: memref<128x128xbf16, #tpu.memory_space<vmem>>, %arg5: memref<1x128xf32, #tpu.memory_space<vmem>>, %arg6: memref<32x128xf32, #tpu.memory_space<vmem>>) attributes {dimension_semantics = [#tpu.dimension_semantics<parallel>], iteration_bounds = array<i64: 1>, scalar_prefetch = 0 : i64, scratch_operands = 0 : i64, tpu.core_type = #tpu.core_type<tc>, window_params = [{transform_indices = @transform_0, window_bounds = array<i64: 32, 128>}, {pipeline_mode = #tpu.pipeline_mode<synchronous>, transform_indices = @transform_1, window_bounds = array<i64: 128, 128>}, {pipeline_mode = #tpu.pipeline_mode<synchronous>, transform_indices = @transform_2, window_bounds = array<i64: 1, 128>}, {pipeline_mode = #tpu.pipeline_mode<synchronous>, transform_indices = @transform_3, window_bounds = array<i64: 128, 128>}, {pipeline_mode = #tpu.pipeline_mode<synchronous>, transform_indices = @transform_4, window_bounds = array<i64: 1, 128>}, {transform_indices = @transform_5, window_bounds = array<i64: 32, 128>}]} {
    %c0 = arith.constant 0 : index
    %c0_0 = arith.constant 0 : index
    %0 = vector.load %arg1[%c0, %c0_0] : memref<32x128xf32, #tpu.memory_space<vmem>>, vector<32x128xf32>
    %1 = arith.truncf %0 : vector<32x128xf32> to vector<32x128xbf16>
    %c0_1 = arith.constant 0 : index
    %c0_2 = arith.constant 0 : index
    %2 = vector.load %arg2[%c0_1, %c0_2] : memref<128x128xbf16, #tpu.memory_space<vmem>>, vector<128x128xbf16>
    %cst = arith.constant dense<0.000000e+00> : vector<32x128xf32>
    %3 = tpu.matmul %1, %2, %cst {dimension_numbers = #tpu.dot_dimension_numbers<[1], [0], [0], [1], [0, 0, 1, 1], [], []>} : vector<32x128xbf16>, vector<128x128xbf16>, vector<32x128xf32> -> vector<32x128xf32>
    %c0_3 = arith.constant 0 : index
    %c0_4 = arith.constant 0 : index
    %4 = vector.load %arg3[%c0_3, %c0_4] : memref<1x128xf32, #tpu.memory_space<vmem>>, vector<1x128xf32>
    %5 = vector.broadcast %4 : vector<1x128xf32> to vector<32x128xf32>
    %6 = arith.addf %3, %5 : vector<32x128xf32>
    %cst_5 = arith.constant 0.707106769 : f32
    %7 = vector.broadcast %cst_5 : f32 to vector<32x128xf32>
    %8 = arith.mulf %6, %7 : vector<32x128xf32>
    %9 = math.absf %8 : vector<32x128xf32>
    %cst_6 = arith.constant 0.327591091 : f32
    %10 = vector.broadcast %cst_6 : f32 to vector<32x128xf32>
    %11 = arith.mulf %10, %9 : vector<32x128xf32>
    %cst_7 = arith.constant 1.000000e+00 : f32
    %12 = vector.broadcast %cst_7 : f32 to vector<32x128xf32>
    %13 = arith.addf %12, %11 : vector<32x128xf32>
    %14 = tpu.reciprocal %13 {approx = true} : vector<32x128xf32> -> vector<32x128xf32>
    %cst_8 = arith.constant 1.06140542 : f32
    %15 = vector.broadcast %cst_8 : f32 to vector<32x128xf32>
    %16 = arith.mulf %14, %15 : vector<32x128xf32>
    %cst_9 = arith.constant -1.45315206 : f32
    %17 = vector.broadcast %cst_9 : f32 to vector<32x128xf32>
    %18 = arith.addf %17, %16 : vector<32x128xf32>
    %19 = arith.mulf %14, %18 : vector<32x128xf32>
    %cst_10 = arith.constant 1.42141378 : f32
    %20 = vector.broadcast %cst_10 : f32 to vector<32x128xf32>
    %21 = arith.addf %20, %19 : vector<32x128xf32>
    %22 = arith.mulf %14, %21 : vector<32x128xf32>
    %cst_11 = arith.constant -0.284496725 : f32
    %23 = vector.broadcast %cst_11 : f32 to vector<32x128xf32>
    %24 = arith.addf %23, %22 : vector<32x128xf32>
    %25 = arith.mulf %14, %24 : vector<32x128xf32>
    %cst_12 = arith.constant 0.254829586 : f32
    %26 = vector.broadcast %cst_12 : f32 to vector<32x128xf32>
    %27 = arith.addf %26, %25 : vector<32x128xf32>
    %28 = arith.mulf %14, %27 : vector<32x128xf32>
    %cst_13 = arith.constant 0.000000e+00 : f32
    %29 = vector.broadcast %cst_13 : f32 to vector<32x128xf32>
    %30 = arith.subf %29, %9 : vector<32x128xf32>
    %31 = arith.mulf %30, %9 : vector<32x128xf32>
    %32 = math.exp %31 : vector<32x128xf32>
    %33 = arith.mulf %28, %32 : vector<32x128xf32>
    %cst_14 = arith.constant 1.000000e+00 : f32
    %34 = vector.broadcast %cst_14 : f32 to vector<32x128xf32>
    %35 = arith.subf %34, %33 : vector<32x128xf32>
    %cst_15 = arith.constant 0.000000e+00 : f32
    %36 = vector.broadcast %cst_15 : f32 to vector<32x128xf32>
    %37 = arith.cmpf oge, %8, %36 : vector<32x128xf32>
    %cst_16 = arith.constant 0.000000e+00 : f32
    %38 = vector.broadcast %cst_16 : f32 to vector<32x128xf32>
    %39 = arith.subf %38, %35 : vector<32x128xf32>
    %40 = arith.select %37, %35, %39 : vector<32x128xi1>, vector<32x128xf32>
    %cst_17 = arith.constant 5.000000e-01 : f32
    %41 = vector.broadcast %cst_17 : f32 to vector<32x128xf32>
    %42 = arith.mulf %41, %6 : vector<32x128xf32>
    %cst_18 = arith.constant 1.000000e+00 : f32
    %43 = vector.broadcast %cst_18 : f32 to vector<32x128xf32>
    %44 = arith.addf %43, %40 : vector<32x128xf32>
    %45 = arith.mulf %42, %44 : vector<32x128xf32>
    %46 = arith.truncf %45 : vector<32x128xf32> to vector<32x128xbf16>
    %c0_19 = arith.constant 0 : index
    %c0_20 = arith.constant 0 : index
    %47 = vector.load %arg4[%c0_19, %c0_20] : memref<128x128xbf16, #tpu.memory_space<vmem>>, vector<128x128xbf16>
    %cst_21 = arith.constant dense<0.000000e+00> : vector<32x128xf32>
    %48 = tpu.matmul %46, %47, %cst_21 {dimension_numbers = #tpu.dot_dimension_numbers<[1], [0], [0], [1], [0, 0, 1, 1], [], []>} : vector<32x128xbf16>, vector<128x128xbf16>, vector<32x128xf32> -> vector<32x128xf32>
    %c0_22 = arith.constant 0 : index
    %c0_23 = arith.constant 0 : index
    %49 = vector.load %arg5[%c0_22, %c0_23] : memref<1x128xf32, #tpu.memory_space<vmem>>, vector<1x128xf32>
    %50 = vector.broadcast %49 : vector<1x128xf32> to vector<32x128xf32>
    %51 = arith.addf %48, %50 : vector<32x128xf32>
    %c0_24 = arith.constant 0 : index
    %c0_25 = arith.constant 0 : index
    %52 = vector.load %arg6[%c0_24, %c0_25] : memref<32x128xf32, #tpu.memory_space<vmem>>, vector<32x128xf32>
    tpu.vector_store %arg6[%c0_24, %c0_25], %51 {strides = array<i32>} : memref<32x128xf32, #tpu.memory_space<vmem>>, vector<32x128xf32>,
    return
  }
  func.func @transform_0(%arg0: i32) -> (i32, i32) {
    %c0_i32 = arith.constant 0 : i32
    %c0_i32_0 = arith.constant 0 : i32
    return %arg0, %c0_i32 : i32, i32
  }
  func.func @transform_1(%arg0: i32) -> (i32, i32) {
    %c0_i32 = arith.constant 0 : i32
    %c0_i32_0 = arith.constant 0 : i32
    %c0_i32_1 = arith.constant 0 : i32
    return %c0_i32, %c0_i32_0 : i32, i32
  }
  func.func @transform_2(%arg0: i32) -> (i32, i32) {
    %c0_i32 = arith.constant 0 : i32
    %c0_i32_0 = arith.constant 0 : i32
    %c0_i32_1 = arith.constant 0 : i32
    return %c0_i32, %c0_i32_0 : i32, i32
  }
  func.func @transform_3(%arg0: i32) -> (i32, i32) {
    %c0_i32 = arith.constant 0 : i32
    %c0_i32_0 = arith.constant 0 : i32
    %c0_i32_1 = arith.constant 0 : i32
    return %c0_i32, %c0_i32_0 : i32, i32
  }
  func.func @transform_4(%arg0: i32) -> (i32, i32) {
    %c0_i32 = arith.constant 0 : i32
    %c0_i32_0 = arith.constant 0 : i32
    %c0_i32_1 = arith.constant 0 : i32
    return %c0_i32, %c0_i32_0 : i32, i32
  }
  func.func @transform_5(%arg0: i32) -> (i32, i32) {
    %c0_i32 = arith.constant 0 : i32
    %c0_i32_0 = arith.constant 0 : i32
    return %arg0, %c0_i32 : i32, i32
  }
}

</mosaic_0001>

<llo_original>
// kernel: tpu_custom_call.1
$region0: #{tpu_custom_call.1}
  #allocation0 [shape = 'u32[]', space=smem, size = 0x4, offset = 0x4, fixed_abs, tag = 'smem constant byte address 0x4 - core index']
  #allocation1 [shape = 'u32[144,128]{1,0:T(1,128)}', space=vmem, size = 0x12000, scoped, tag = 'internal scratch']
  %s0 = inlined_call_operand.hbm [shape: f32[32,128], index: 0, kind: input, shape index: {}]
  %s1 = inlined_call_operand.hbm [shape: bf16[128,128], index: 1, kind: input, shape index: {}]
  %s2 = inlined_call_operand.vmem [shape: f32[1,128], index: 2, kind: input, shape index: {}]
  %s3 = inlined_call_operand.hbm [shape: bf16[128,128], index: 3, kind: input, shape index: {}]
  %s4 = inlined_call_operand.vmem [shape: f32[1,128], index: 4, kind: input, shape index: {}]
  %s5 = inlined_call_operand.hbm [shape: f32[32,128], index: 5, kind: output, shape index: {}]
  %s6 = sld [smem:[#allocation0]]
  $region42: #{tpu_custom_call.1} parent=0
    _
  %s8 = ssub.s32 1, %s6
  %s9 = scalar_select 0, %s8, %s6
  $region1: #{tpu_custom_call.1} parent=0
    #allocation2 [shape = 'u8[16384]{0}', space=vmem, size = 0x4000, scoped, tag = 'input window, operand 0, single buffered']
    #allocation3 [shape = 's32[1]{0}', space=sflag, size = 0x4, scoped, tag = 'scoped memory for tpu_custom_call.1']
    #allocation4 [shape = 's32[1]{0}', space=sflag, size = 0x4, scoped, tag = 'scoped memory for tpu_custom_call.1']
    #allocation5 [shape = 'u8[32768]{0}', space=vmem, size = 0x8000, scoped, tag = 'input window, operand 1, single buffered']
    #allocation6 [shape = 's32[1]{0}', space=sflag, size = 0x4, scoped, tag = 'scoped memory for tpu_custom_call.1']
    #allocation7 [shape = 'u8[32768]{0}', space=vmem, size = 0x8000, scoped, tag = 'input window, operand 3, single buffered']
    #allocation8 [shape = 'u8[16384]{0}', space=vmem, size = 0x4000, scoped, tag = 'output window, operand 0, single buffered']
    %10 = vsyncpa [#allocation3], 0
    %11 = vsyncpa [#allocation6], 0
    %12 = vsyncpa [#allocation4], 0
    // Predicated region
    $region2: #{tpu_custom_call.1} parent=1 // pred_check
      _
    $region3: #{tpu_custom_call.1} parent=1 // pred_check_branch
      %14 = sbr.rel (0) target = $region5
    $region4: #{tpu_custom_call.1} parent=1 // pred_region
      %s16 = ssub.s32 512, 512
      %17 = vsyncadd [#allocation3], %s16
      %s18 = sshll.u32 [#allocation2], 4
      %s19 = int_to_ptr.vmem [resolvable:$true] %s18
      %24 = dma.hbm_to_vmem [thread:$0]  %s0, 512, %s19, [#allocation3], 128, 128, 8
    $region5: #{tpu_custom_call.1} parent=1 // pred_fallthru
      _
    // Predicated region
    $region6: #{tpu_custom_call.1} parent=1 // pred_check
      _
    $region7: #{tpu_custom_call.1} parent=1 // pred_check_branch
      %26 = sbr.rel (0) target = $region9
    $region8: #{tpu_custom_call.1} parent=1 // pred_region
      %s28 = ssub.s32 1024, 1024
      %29 = vsyncadd [#allocation6], %s28
      %s30 = sshll.u32 [#allocation5], 4
      %s31 = int_to_ptr.vmem [resolvable:$true] %s30
      %36 = dma.hbm_to_vmem [thread:$0]  %s1, 1024, %s31, [#allocation6], 64, 64, 4
    $region9: #{tpu_custom_call.1} parent=1 // pred_fallthru
      _
    // Predicated region
    $region10: #{tpu_custom_call.1} parent=1 // pred_check
      _
    $region11: #{tpu_custom_call.1} parent=1 // pred_check_branch
      %38 = sbr.rel (0) target = $region13
    $region12: #{tpu_custom_call.1} parent=1 // pred_region
      _
    $region13: #{tpu_custom_call.1} parent=1 // pred_fallthru
      _
    // Predicated region
    $region14: #{tpu_custom_call.1} parent=1 // pred_check
      _
    $region15: #{tpu_custom_call.1} parent=1 // pred_check_branch
      %40 = sbr.rel (0) target = $region17
    $region16: #{tpu_custom_call.1} parent=1 // pred_region
      %s42 = ssub.s32 1024, 1024
      %43 = vsyncadd [#allocation6], %s42
      %s44 = sshll.u32 [#allocation7], 4
      %s45 = int_to_ptr.vmem [resolvable:$true] %s44
      %50 = dma.hbm_to_vmem [thread:$0]  %s3, 1024, %s45, [#allocation6], 64, 64, 4
    $region17: #{tpu_custom_call.1} parent=1 // pred_fallthru
      _
    // Predicated region
    $region18: #{tpu_custom_call.1} parent=1 // pred_check
      _
    $region19: #{tpu_custom_call.1} parent=1 // pred_check_branch
      %52 = sbr.rel (0) target = $region21
    $region20: #{tpu_custom_call.1} parent=1 // pred_region
      _
    $region21: #{tpu_custom_call.1} parent=1 // pred_fallthru
      _
    // Predicated region
    $region22: #{tpu_custom_call.1} parent=1 // pred_check
      _
    $region23: #{tpu_custom_call.1} parent=1 // pred_check_branch
      %54 = sbr.rel (0) target = $region25
    $region24: #{tpu_custom_call.1} parent=1 // pred_region
      %55 = dma.done [#allocation3], 512
    $region25: #{tpu_custom_call.1} parent=1 // pred_fallthru
      _
    // Predicated region
    $region26: #{tpu_custom_call.1} parent=1 // pred_check
      _
    $region27: #{tpu_custom_call.1} parent=1 // pred_check_branch
      %57 = sbr.rel (0) target = $region29
    $region28: #{tpu_custom_call.1} parent=1 // pred_region
      %58 = dma.done [#allocation6], 1024
    $region29: #{tpu_custom_call.1} parent=1 // pred_fallthru
      _
    // Predicated region
    $region30: #{tpu_custom_call.1} parent=1 // pred_check
      _
    $region31: #{tpu_custom_call.1} parent=1 // pred_check_branch
      %60 = sbr.rel (0) target = $region33
    $region32: #{tpu_custom_call.1} parent=1 // pred_region
      %61 = dma.done [#allocation6], 1024
    $region33: #{tpu_custom_call.1} parent=1 // pred_fallthru
      _
    %v63 = vld [vmem:[#allocation2] sm:$0xff]
    %v64 = vld [vmem:[#allocation2 + $0x8] sm:$0xff]
    %v65 = vld [vmem:[#allocation2 + $0x10] sm:$0xff]
    %v66 = vld [vmem:[#allocation2 + $0x18] sm:$0xff]
    %v67 = vpack.c.bf16 %v64, %v63
    %v68 = vpack.c.bf16 %v66, %v65
    %v69 = vld [vmem:[#allocation5] sm:$0xf]
    %v70 = vld [vmem:[#allocation5 + $0x4] sm:$0xf]
    %v71 = vld [vmem:[#allocation5 + $0x8] sm:$0xf]
    %v72 = vld [vmem:[#allocation5 + $0xc] sm:$0xf]
    %v73 = vld [vmem:[#allocation5 + $0x10] sm:$0xf]
    %v74 = vld [vmem:[#allocation5 + $0x14] sm:$0xf]
    %v75 = vld [vmem:[#allocation5 + $0x18] sm:$0xf]
    %v76 = vld [vmem:[#allocation5 + $0x1c] sm:$0xf]
    %v77 = vld [vmem:[#allocation5 + $0x20] sm:$0xf]
    %v78 = vld [vmem:[#allocation5 + $0x24] sm:$0xf]
    %v79 = vld [vmem:[#allocation5 + $0x28] sm:$0xf]
    %v80 = vld [vmem:[#allocation5 + $0x2c] sm:$0xf]
    %v81 = vld [vmem:[#allocation5 + $0x30] sm:$0xf]
    %v82 = vld [vmem:[#allocation5 + $0x34] sm:$0xf]
    %v83 = vld [vmem:[#allocation5 + $0x38] sm:$0xf]
    %v84 = vld [vmem:[#allocation5 + $0x3c] sm:$0xf]
    %v85 = vld [vmem:[%s2] sm:$0x1]
    %v87 = vlaneseq
    %v88 = vshrl.u32 %v87, 7
    %v89 = vsub.s32 0, %v88
    %v90 = vrot.slane %v85, %v89
    %v108 = vunpack.c.l.b16 %v69
    %v109 = vunpack.c.l.b16 %v70
    %v110 = vunpack.c.l.b16 %v71
    %v111 = vunpack.c.l.b16 %v72
    %v112 = vunpack.c.l.b16 %v73
    %v113 = vunpack.c.l.b16 %v74
    %v114 = vunpack.c.l.b16 %v75
    %v115 = vunpack.c.l.b16 %v76
    %v116 = vunpack.c.l.b16 %v77
    %v117 = vunpack.c.l.b16 %v78
    %v118 = vunpack.c.l.b16 %v79
    %v119 = vunpack.c.l.b16 %v80
    %v120 = vunpack.c.l.b16 %v81
    %v121 = vunpack.c.l.b16 %v82
    %v122 = vunpack.c.l.b16 %v83
    %v123 = vunpack.c.l.b16 %v84
    %v124 = vpack.c.b16 %v109, %v108
    %v125 = vpack.c.b16 %v111, %v110
    %v126 = vpack.c.b16 %v113, %v112
    %v127 = vpack.c.b16 %v115, %v114
    %v128 = vpack.c.b16 %v117, %v116
    %v129 = vpack.c.b16 %v119, %v118
    %v130 = vpack.c.b16 %v121, %v120
    %v131 = vpack.c.b16 %v123, %v122
    %140 = vmatprep.subr.bf16.mxu0 0
    %141 = vmatpush1.bf16.msra.mxu0 %v124
    %142 = vmatprep.subr.bf16.mxu0 0
    %143 = vmatpush1.bf16.msra.mxu0 %v125
    %144 = vmatprep.subr.bf16.mxu0 0
    %145 = vmatpush1.bf16.msra.mxu0 %v126
    %146 = vmatprep.subr.bf16.mxu0 0
    %147 = vmatpush1.bf16.msra.mxu0 %v127
    %148 = vmatprep.subr.bf16.mxu0 0
    %149 = vmatpush1.bf16.msra.mxu0 %v128
    %150 = vmatprep.subr.bf16.mxu0 0
    %151 = vmatpush1.bf16.msra.mxu0 %v129
    %152 = vmatprep.subr.bf16.mxu0 0
    %153 = vmatpush1.bf16.msra.mxu0 %v130
    %154 = vmatprep.subr.bf16.mxu0 0
    %155 = vmatpush1.bf16.msra.mxu0 %v131
    %156 = vmatprep.subr.bf16.mxu0 0
    %157 = vmatpush1.bf16.msra.mxu0 0
    %158 = vmatprep.subr.bf16.mxu0 0
    %159 = vmatpush1.bf16.msra.mxu0 0
    %160 = vmatprep.subr.bf16.mxu0 0
    %161 = vmatpush1.bf16.msra.mxu0 0
    %162 = vmatprep.subr.bf16.mxu0 0
    %163 = vmatpush1.bf16.msra.mxu0 0
    %164 = vmatprep.subr.bf16.mxu0 0
    %165 = vmatpush1.bf16.msra.mxu0 0
    %166 = vmatprep.subr.bf16.mxu0 0
    %167 = vmatpush1.bf16.msra.mxu0 0
    %168 = vmatprep.subr.bf16.mxu0 0
    %169 = vmatpush1.bf16.msra.mxu0 0
    %170 = vmatprep.subr.bf16.mxu0 0
    %171 = vmatpush1.bf16.msra.mxu0 0
    %172 = vmatprep.mubr.bf16.mxu0 0
    %173 = vmatmul.mubr.bf16.gmra.mrb[0].mxu0 %v67
    %v174 = vpop.f32.mrb[0].mxu0
    %v175 = vadd.f32 %v90, %v174
    %v176 = vpop.f32.mrb[0].mxu0
    %v177 = vpop.f32.mrb[0].mxu0
    %v178 = vadd.f32 %v90, %v177
    %v179 = vpop.f32.mrb[0].mxu0
    %180 = vmatprep.mubr.bf16.mxu0 0
    %181 = vmatmul.mubr.bf16.gmra.mrb[0].mxu0 %v68
    %v182 = vpop.f32.mrb[0].mxu0
    %v183 = vadd.f32 %v90, %v182
    %v184 = vpop.f32.mrb[0].mxu0
    %v185 = vpop.f32.mrb[0].mxu0
    %v186 = vadd.f32 %v90, %v185
    %v187 = vpop.f32.mrb[0].mxu0
    %188 = vdwg.mxu0
    %v189 = vmul.f32 %v175, 0.70710677
    %v190 = vmul.f32 %v178, 0.70710677
    %v191 = vmul.f32 %v183, 0.70710677
    %v192 = vmul.f32 %v186, 0.70710677
    %v193 = vand.u32 2147483647, %v189
    %v194 = vand.u32 2147483647, %v190
    %v195 = vand.u32 2147483647, %v191
    %v196 = vand.u32 2147483647, %v192
    %v197 = vmul.f32 %v193, 0.3275911
    %v198 = vmul.f32 %v194, 0.3275911
    %v199 = vmul.f32 %v195, 0.3275911
    %v200 = vmul.f32 %v196, 0.3275911
    %v201 = vadd.f32 %v197, 1.0
    %v202 = vadd.f32 %v198, 1.0
    %v203 = vadd.f32 %v199, 1.0
    %v204 = vadd.f32 %v200, 1.0
    %v205 = vrcp.pop %v201
    %v206 = vrcp.pop %v202
    %v207 = vrcp.pop %v203
    %v208 = vrcp.pop %v204
    %v209 = vmul.f32 %v205, 1.0614054
    %v210 = vmul.f32 %v206, 1.0614054
    %v211 = vmul.f32 %v207, 1.0614054
    %v212 = vmul.f32 %v208, 1.0614054
    %v213 = vadd.f32 %v209, -1.4531521
    %v214 = vadd.f32 %v210, -1.4531521
    %v215 = vadd.f32 %v211, -1.4531521
    %v216 = vadd.f32 %v212, -1.4531521
    %v217 = vmul.f32 %v205, %v213
    %v218 = vmul.f32 %v206, %v214
    %v219 = vmul.f32 %v207, %v215
    %v220 = vmul.f32 %v208, %v216
    %v221 = vadd.f32 %v217, 1.4214138
    %v222 = vadd.f32 %v218, 1.4214138
    %v223 = vadd.f32 %v219, 1.4214138
    %v224 = vadd.f32 %v220, 1.4214138
    %v225 = vmul.f32 %v205, %v221
    %v226 = vmul.f32 %v206, %v222
    %v227 = vmul.f32 %v207, %v223
    %v228 = vmul.f32 %v208, %v224
    %v229 = vadd.f32 %v225, -0.28449672
    %v230 = vadd.f32 %v226, -0.28449672
    %v231 = vadd.f32 %v227, -0.28449672
    %v232 = vadd.f32 %v228, -0.28449672
    %v233 = vmul.f32 %v205, %v229
    %v234 = vmul.f32 %v206, %v230
    %v235 = vmul.f32 %v207, %v231
    %v236 = vmul.f32 %v208, %v232
    %v237 = vadd.f32 %v233, 0.2548296
    %v238 = vadd.f32 %v234, 0.2548296
    %v239 = vadd.f32 %v235, 0.2548296
    %v240 = vadd.f32 %v236, 0.2548296
    %v241 = vmul.f32 %v205, %v237
    %v242 = vmul.f32 %v206, %v238
    %v243 = vmul.f32 %v207, %v239
    %v244 = vmul.f32 %v208, %v240
    %v245 = vsub.f32 0.0, %v193
    %v246 = vsub.f32 0.0, %v194
    %v247 = vsub.f32 0.0, %v195
    %v248 = vsub.f32 0.0, %v196
    %v249 = vmul.f32 %v245, %v193
    %v250 = vmul.f32 %v246, %v194
    %v251 = vmul.f32 %v247, %v195
    %v252 = vmul.f32 %v248, %v196
    %v253 = vmul.f32 %v249, 1.442695
    %v254 = vpow.pop %v253
    %v255 = vmul.f32 %v250, 1.442695
    %v256 = vpow.pop %v255
    %v257 = vmul.f32 %v251, 1.442695
    %v258 = vpow.pop %v257
    %v259 = vmul.f32 %v252, 1.442695
    %v260 = vpow.pop %v259
    %v261 = vmul.f32 %v241, %v254
    %v262 = vmul.f32 %v242, %v256
    %v263 = vmul.f32 %v243, %v258
    %v264 = vmul.f32 %v244, %v260
    %v265 = vsub.f32 1.0, %v261
    %v266 = vsub.f32 1.0, %v262
    %v267 = vsub.f32 1.0, %v263
    %v268 = vsub.f32 1.0, %v264
    %vm269 = vcmp.ge.f32.partialorder %v189, 0.0
    %vm270 = vcmp.ge.f32.partialorder %v190, 0.0
    %vm271 = vcmp.ge.f32.partialorder %v191, 0.0
    %vm272 = vcmp.ge.f32.partialorder %v192, 0.0
    %v273 = vsub.f32 0.0, %v265
    %v274 = vsub.f32 0.0, %v266
    %v275 = vsub.f32 0.0, %v267
    %v276 = vsub.f32 0.0, %v268
    %v277 = vsel %vm269, %v265, %v273
    %v278 = vsel %vm270, %v266, %v274
    %v279 = vsel %vm271, %v267, %v275
    %v280 = vsel %vm272, %v268, %v276
    %v281 = vmul.f32 %v175, 0.5
    %v282 = vmul.f32 %v178, 0.5
    %v283 = vmul.f32 %v183, 0.5
    %v284 = vmul.f32 %v186, 0.5
    %v285 = vadd.f32 %v277, 1.0
    %v286 = vadd.f32 %v278, 1.0
    %v287 = vadd.f32 %v279, 1.0
    %v288 = vadd.f32 %v280, 1.0
    %v289 = vmul.f32 %v281, %v285
    %v290 = vmul.f32 %v282, %v286
    %v291 = vmul.f32 %v283, %v287
    %v292 = vmul.f32 %v284, %v288
    %v293 = vpack.c.bf16 %v290, %v289
    %v294 = vpack.c.bf16 %v292, %v291
    %v295 = vld [vmem:[#allocation7] sm:$0xf]
    %v296 = vld [vmem:[#allocation7 + $0x4] sm:$0xf]
    %v297 = vld [vmem:[#allocation7 + $0x8] sm:$0xf]
    %v298 = vld [vmem:[#allocation7 + $0xc] sm:$0xf]
    %v299 = vld [vmem:[#allocation7 + $0x10] sm:$0xf]
    %v300 = vld [vmem:[#allocation7 + $0x14] sm:$0xf]
    %v301 = vld [vmem:[#allocation7 + $0x18] sm:$0xf]
    %v302 = vld [vmem:[#allocation7 + $0x1c] sm:$0xf]
    %v303 = vld [vmem:[#allocation7 + $0x20] sm:$0xf]
    %v304 = vld [vmem:[#allocation7 + $0x24] sm:$0xf]
    %v305 = vld [vmem:[#allocation7 + $0x28] sm:$0xf]
    %v306 = vld [vmem:[#allocation7 + $0x2c] sm:$0xf]
    %v307 = vld [vmem:[#allocation7 + $0x30] sm:$0xf]
    %v308 = vld [vmem:[#allocation7 + $0x34] sm:$0xf]
    %v309 = vld [vmem:[#allocation7 + $0x38] sm:$0xf]
    %v310 = vld [vmem:[#allocation7 + $0x3c] sm:$0xf]
    %v311 = vld [vmem:[%s4] sm:$0x1]
    %v313 = vlaneseq
    %v314 = vshrl.u32 %v313, 7
    %v315 = vsub.s32 0, %v314
    %v316 = vrot.slane %v311, %v315
    %v334 = vunpack.c.l.b16 %v295
    %v335 = vunpack.c.l.b16 %v296
    %v336 = vunpack.c.l.b16 %v297
    %v337 = vunpack.c.l.b16 %v298
    %v338 = vunpack.c.l.b16 %v299
    %v339 = vunpack.c.l.b16 %v300
    %v340 = vunpack.c.l.b16 %v301
    %v341 = vunpack.c.l.b16 %v302
    %v342 = vunpack.c.l.b16 %v303
    %v343 = vunpack.c.l.b16 %v304
    %v344 = vunpack.c.l.b16 %v305
    %v345 = vunpack.c.l.b16 %v306
    %v346 = vunpack.c.l.b16 %v307
    %v347 = vunpack.c.l.b16 %v308
    %v348 = vunpack.c.l.b16 %v309
    %v349 = vunpack.c.l.b16 %v310
    %v350 = vpack.c.b16 %v335, %v334
    %v351 = vpack.c.b16 %v337, %v336
    %v352 = vpack.c.b16 %v339, %v338
    %v353 = vpack.c.b16 %v341, %v340
    %v354 = vpack.c.b16 %v343, %v342
    %v355 = vpack.c.b16 %v345, %v344
    %v356 = vpack.c.b16 %v347, %v346
    %v357 = vpack.c.b16 %v349, %v348
    %366 = vmatprep.subr.bf16.mxu0 0
    %367 = vmatpush1.bf16.msra.mxu0 %v350
    %368 = vmatprep.subr.bf16.mxu0 0
    %369 = vmatpush1.bf16.msra.mxu0 %v351
    %370 = vmatprep.subr.bf16.mxu0 0
    %371 = vmatpush1.bf16.msra.mxu0 %v352
    %372 = vmatprep.subr.bf16.mxu0 0
    %373 = vmatpush1.bf16.msra.mxu0 %v353
    %374 = vmatprep.subr.bf16.mxu0 0
    %375 = vmatpush1.bf16.msra.mxu0 %v354
    %376 = vmatprep.subr.bf16.mxu0 0
    %377 = vmatpush1.bf16.msra.mxu0 %v355
    %378 = vmatprep.subr.bf16.mxu0 0
    %379 = vmatpush1.bf16.msra.mxu0 %v356
    %380 = vmatprep.subr.bf16.mxu0 0
    %381 = vmatpush1.bf16.msra.mxu0 %v357
    %382 = vmatprep.subr.bf16.mxu0 0
    %383 = vmatpush1.bf16.msra.mxu0 0
    %384 = vmatprep.subr.bf16.mxu0 0
    %385 = vmatpush1.bf16.msra.mxu0 0
    %386 = vmatprep.subr.bf16.mxu0 0
    %387 = vmatpush1.bf16.msra.mxu0 0
    %388 = vmatprep.subr.bf16.mxu0 0
    %389 = vmatpush1.bf16.msra.mxu0 0
    %390 = vmatprep.subr.bf16.mxu0 0
    %391 = vmatpush1.bf16.msra.mxu0 0
    %392 = vmatprep.subr.bf16.mxu0 0
    %393 = vmatpush1.bf16.msra.mxu0 0
    %394 = vmatprep.subr.bf16.mxu0 0
    %395 = vmatpush1.bf16.msra.mxu0 0
    %396 = vmatprep.subr.bf16.mxu0 0
    %397 = vmatpush1.bf16.msra.mxu0 0
    %398 = vmatprep.mubr.bf16.mxu0 0
    %399 = vmatmul.mubr.bf16.gmra.mrb[0].mxu0 %v293
    %v400 = vpop.f32.mrb[0].mxu0
    %v401 = vadd.f32 %v316, %v400
    %v402 = vpop.f32.mrb[0].mxu0
    %v403 = vpop.f32.mrb[0].mxu0
    %v404 = vadd.f32 %v316, %v403
    %v405 = vpop.f32.mrb[0].mxu0
    %406 = vmatprep.mubr.bf16.mxu0 0
    %407 = vmatmul.mubr.bf16.gmra.mrb[0].mxu0 %v294
    %v408 = vpop.f32.mrb[0].mxu0
    %v409 = vadd.f32 %v316, %v408
    %v410 = vpop.f32.mrb[0].mxu0
    %v411 = vpop.f32.mrb[0].mxu0
    %v412 = vadd.f32 %v316, %v411
    %v413 = vpop.f32.mrb[0].mxu0
    %414 = vdwg.mxu0
    %415 = vst [vmem:[#allocation8] sm:$0xff] %v401
    %416 = vst [vmem:[#allocation8 + $0x8] sm:$0xff] %v404
    %417 = vst [vmem:[#allocation8 + $0x10] sm:$0xff] %v409
    %418 = vst [vmem:[#allocation8 + $0x18] sm:$0xff] %v412
    // Predicated region
    $region34: #{tpu_custom_call.1} parent=1 // pred_check
      _
    $region35: #{tpu_custom_call.1} parent=1 // pred_check_branch
      %420 = sbr.rel (0) target = $region37
    $region36: #{tpu_custom_call.1} parent=1 // pred_region
      %s422 = ssub.s32 512, 512
      %423 = vsyncadd [#allocation4], %s422
      %s424 = sshll.u32 [#allocation8], 4
      %s425 = int_to_ptr.vmem [resolvable:$true] %s424
      %430 = dma.vmem_to_hbm [thread:$0]  %s425, 512, %s5, [#allocation4], 128, 128, 8
    $region37: #{tpu_custom_call.1} parent=1 // pred_fallthru
      _
    // Predicated region
    $region38: #{tpu_custom_call.1} parent=1 // pred_check
      _
    $region39: #{tpu_custom_call.1} parent=1 // pred_check_branch
      %432 = sbr.rel (0) target = $region41
    $region40: #{tpu_custom_call.1} parent=1 // pred_region
      %433 = dma.done [#allocation4], 512
    $region41: #{tpu_custom_call.1} parent=1 // pred_fallthru
      _
    %434 = vsyncpa [#allocation3], 1
    %435 = vsyncpa [#allocation6], 1
    %436 = vsyncpa [#allocation4], 1

// kernel: tpu_custom_call.1
$region0: #{tpu_custom_call.1}
  #allocation0 [shape = 'u32[]', space=smem, size = 0x4, offset = 0x4, fixed_abs, tag = 'smem constant byte address 0x4 - core index']
  #allocation1 [shape = 'u32[144,128]{1,0:T(1,128)}', space=vmem, size = 0x12000, scoped, tag = 'internal scratch']
  %s0 = inlined_call_operand.hbm [shape: f32[32,128], index: 0, kind: input, shape index: {}]
  %s1 = inlined_call_operand.hbm [shape: bf16[128,128], index: 1, kind: input, shape index: {}]
  %s2 = inlined_call_operand.vmem [shape: f32[1,128], index: 2, kind: input, shape index: {}]
  %s3 = inlined_call_operand.hbm [shape: bf16[128,128], index: 3, kind: input, shape index: {}]
  %s4 = inlined_call_operand.vmem [shape: f32[1,128], index: 4, kind: input, shape index: {}]
  %s5 = inlined_call_operand.hbm [shape: f32[32,128], index: 5, kind: output, shape index: {}]
  %s6 = sld [smem:[#allocation0]]
  $region42: #{tpu_custom_call.1} parent=0
    _
  %s8 = ssub.s32 1, %s6
  %s9 = scalar_select 0, %s8, %s6
  $region1: #{tpu_custom_call.1} parent=0
    #allocation2 [shape = 'u8[16384]{0}', space=vmem, size = 0x4000, scoped, tag = 'input window, operand 0, single buffered']
    #allocation3 [shape = 's32[1]{0}', space=sflag, size = 0x4, scoped, tag = 'scoped memory for tpu_custom_call.1']
    #allocation4 [shape = 's32[1]{0}', space=sflag, size = 0x4, scoped, tag = 'scoped memory for tpu_custom_call.1']
    #allocation5 [shape = 'u8[32768]{0}', space=vmem, size = 0x8000, scoped, tag = 'input window, operand 1, single buffered']
    #allocation6 [shape = 's32[1]{0}', space=sflag, size = 0x4, scoped, tag = 'scoped memory for tpu_custom_call.1']
    #allocation7 [shape = 'u8[32768]{0}', space=vmem, size = 0x8000, scoped, tag = 'input window, operand 3, single buffered']
    #allocation8 [shape = 'u8[16384]{0}', space=vmem, size = 0x4000, scoped, tag = 'output window, operand 0, single buffered']
    %10 = vsyncpa [#allocation3], 0
    %11 = vsyncpa [#allocation6], 0
    %12 = vsyncpa [#allocation4], 0
    // Predicated region
    $region2: #{tpu_custom_call.1} parent=1 // pred_check
      _
    $region3: #{tpu_custom_call.1} parent=1 // pred_check_branch
      %14 = sbr.rel (0) target = $region5
    $region4: #{tpu_custom_call.1} parent=1 // pred_region
      %s16 = ssub.s32 512, 512
      %17 = vsyncadd [#allocation3], %s16
      %s18 = sshll.u32 [#allocation2], 4
      %s19 = int_to_ptr.vmem [resolvable:$true] %s18
      %24 = dma.hbm_to_vmem [thread:$0]  %s0, 512, %s19, [#allocation3], 128, 128, 8
    $region5: #{tpu_custom_call.1} parent=1 // pred_fallthru
      _
    // Predicated region
    $region6: #{tpu_custom_call.1} parent=1 // pred_check
      _
    $region7: #{tpu_custom_call.1} parent=1 // pred_check_branch
      %26 = sbr.rel (0) target = $region9
    $region8: #{tpu_custom_call.1} parent=1 // pred_region
      %s28 = ssub.s32 1024, 1024
      %29 = vsyncadd [#allocation6], %s28
      %s30 = sshll.u32 [#allocation5], 4
      %s31 = int_to_ptr.vmem [resolvable:$true] %s30
      %36 = dma.hbm_to_vmem [thread:$0]  %s1, 1024, %s31, [#allocation6], 64, 64, 4
    $region9: #{tpu_custom_call.1} parent=1 // pred_fallthru
      _
    // Predicated region
    $region10: #{tpu_custom_call.1} parent=1 // pred_check
      _
    $region11: #{tpu_custom_call.1} parent=1 // pred_check_branch
      %38 = sbr.rel (0) target = $region13
    $region12: #{tpu_custom_call.1} parent=1 // pred_region
      _
    $region13: #{tpu_custom_call.1} parent=1 // pred_fallthru
      _
    // Predicated region
    $region14: #{tpu_custom_call.1} parent=1 // pred_check
      _
    $region15: #{tpu_custom_call.1} parent=1 // pred_check_branch
      %40 = sbr.rel (0) target = $region17
    $region16: #{tpu_custom_call.1} parent=1 // pred_region
      %s42 = ssub.s32 1024, 1024
      %43 = vsyncadd [#allocation6], %s42
      %s44 = sshll.u32 [#allocation7], 4
      %s45 = int_to_ptr.vmem [resolvable:$true] %s44
      %50 = dma.hbm_to_vmem [thread:$0]  %s3, 1024, %s45, [#allocation6], 64, 64, 4
    $region17: #{tpu_custom_call.1} parent=1 // pred_fallthru
      _
    // Predicated region
    $region18: #{tpu_custom_call.1} parent=1 // pred_check
      _
    $region19: #{tpu_custom_call.1} parent=1 // pred_check_branch
      %52 = sbr.rel (0) target = $region21
    $region20: #{tpu_custom_call.1} parent=1 // pred_region
      _
    $region21: #{tpu_custom_call.1} parent=1 // pred_fallthru
      _
    // Predicated region
    $region22: #{tpu_custom_call.1} parent=1 // pred_check
      _
    $region23: #{tpu_custom_call.1} parent=1 // pred_check_branch
      %54 = sbr.rel (0) target = $region25
    $region24: #{tpu_custom_call.1} parent=1 // pred_region
      %55 = dma.done [#allocation3], 512
    $region25: #{tpu_custom_call.1} parent=1 // pred_fallthru
      _
    // Predicated region
    $region26: #{tpu_custom_call.1} parent=1 // pred_check
      _
    $region27: #{tpu_custom_call.1} parent=1 // pred_check_branch
      %57 = sbr.rel (0) target = $region29
    $region28: #{tpu_custom_call.1} parent=1 // pred_region
      %58 = dma.done [#allocation6], 1024
    $region29: #{tpu_custom_call.1} parent=1 // pred_fallthru
      _
    // Predicated region
    $region30: #{tpu_custom_call.1} parent=1 // pred_check
      _
    $region31: #{tpu_custom_call.1} parent=1 // pred_check_branch
      %60 = sbr.rel (0) target = $region33
    $region32: #{tpu_custom_call.1} parent=1 // pred_region
      %61 = dma.done [#allocation6], 1024
    $region33: #{tpu_custom_call.1} parent=1 // pred_fallthru
      _
    %v63 = vld [vmem:[#allocation2] sm:$0xff]
    %v64 = vld [vmem:[#allocation2 + $0x8] sm:$0xff]
    %v65 = vld [vmem:[#allocation2 + $0x10] sm:$0xff]
    %v66 = vld [vmem:[#allocation2 + $0x18] sm:$0xff]
    %v67 = vpack.c.bf16 %v64, %v63
    %v68 = vpack.c.bf16 %v66, %v65
    %v69 = vld [vmem:[#allocation5] sm:$0xf]
    %v70 = vld [vmem:[#allocation5 + $0x4] sm:$0xf]
    %v71 = vld [vmem:[#allocation5 + $0x8] sm:$0xf]
    %v72 = vld [vmem:[#allocation5 + $0xc] sm:$0xf]
    %v73 = vld [vmem:[#allocation5 + $0x10] sm:$0xf]
    %v74 = vld [vmem:[#allocation5 + $0x14] sm:$0xf]
    %v75 = vld [vmem:[#allocation5 + $0x18] sm:$0xf]
    %v76 = vld [vmem:[#allocation5 + $0x1c] sm:$0xf]
    %v77 = vld [vmem:[#allocation5 + $0x20] sm:$0xf]
    %v78 = vld [vmem:[#allocation5 + $0x24] sm:$0xf]
    %v79 = vld [vmem:[#allocation5 + $0x28] sm:$0xf]
    %v80 = vld [vmem:[#allocation5 + $0x2c] sm:$0xf]
    %v81 = vld [vmem:[#allocation5 + $0x30] sm:$0xf]
    %v82 = vld [vmem:[#allocation5 + $0x34] sm:$0xf]
    %v83 = vld [vmem:[#allocation5 + $0x38] sm:$0xf]
    %v84 = vld [vmem:[#allocation5 + $0x3c] sm:$0xf]
    %v85 = vld [vmem:[%s2] sm:$0x1]
    %v87 = vlaneseq
    %v88 = vshrl.u32 %v87, 7
    %v89 = vsub.s32 0, %v88
    %v90 = vrot.slane %v85, %v89
    %v108 = vunpack.c.l.b16 %v69
    %v109 = vunpack.c.l.b16 %v70
    %v110 = vunpack.c.l.b16 %v71
    %v111 = vunpack.c.l.b16 %v72
    %v112 = vunpack.c.l.b16 %v73
    %v113 = vunpack.c.l.b16 %v74
    %v114 = vunpack.c.l.b16 %v75
    %v115 = vunpack.c.l.b16 %v76
    %v116 = vunpack.c.l.b16 %v77
    %v117 = vunpack.c.l.b16 %v78
    %v118 = vunpack.c.l.b16 %v79
    %v119 = vunpack.c.l.b16 %v80
    %v120 = vunpack.c.l.b16 %v81
    %v121 = vunpack.c.l.b16 %v82
    %v122 = vunpack.c.l.b16 %v83
    %v123 = vunpack.c.l.b16 %v84
    %v124 = vpack.c.b16 %v109, %v108
    %v125 = vpack.c.b16 %v111, %v110
    %v126 = vpack.c.b16 %v113, %v112
    %v127 = vpack.c.b16 %v115, %v114
    %v128 = vpack.c.b16 %v117, %v116
    %v129 = vpack.c.b16 %v119, %v118
    %v130 = vpack.c.b16 %v121, %v120
    %v131 = vpack.c.b16 %v123, %v122
    %140 = vmatprep.subr.bf16.mxu0 0
    %141 = vmatpush1.bf16.msra.mxu0 %v124
    %142 = vmatprep.subr.bf16.mxu0 0
    %143 = vmatpush1.bf16.msra.mxu0 %v125
    %144 = vmatprep.subr.bf16.mxu0 0
    %145 = vmatpush1.bf16.msra.mxu0 %v126
    %146 = vmatprep.subr.bf16.mxu0 0
    %147 = vmatpush1.bf16.msra.mxu0 %v127
    %148 = vmatprep.subr.bf16.mxu0 0
    %149 = vmatpush1.bf16.msra.mxu0 %v128
    %150 = vmatprep.subr.bf16.mxu0 0
    %151 = vmatpush1.bf16.msra.mxu0 %v129
    %152 = vmatprep.subr.bf16.mxu0 0
    %153 = vmatpush1.bf16.msra.mxu0 %v130
    %154 = vmatprep.subr.bf16.mxu0 0
    %155 = vmatpush1.bf16.msra.mxu0 %v131
    %156 = vmatprep.subr.bf16.mxu0 0
    %157 = vmatpush1.bf16.msra.mxu0 0
    %158 = vmatprep.subr.bf16.mxu0 0
    %159 = vmatpush1.bf16.msra.mxu0 0
    %160 = vmatprep.subr.bf16.mxu0 0
    %161 = vmatpush1.bf16.msra.mxu0 0
    %162 = vmatprep.subr.bf16.mxu0 0
    %163 = vmatpush1.bf16.msra.mxu0 0
    %164 = vmatprep.subr.bf16.mxu0 0
    %165 = vmatpush1.bf16.msra.mxu0 0
    %166 = vmatprep.subr.bf16.mxu0 0
    %167 = vmatpush1.bf16.msra.mxu0 0
    %168 = vmatprep.subr.bf16.mxu0 0
    %169 = vmatpush1.bf16.msra.mxu0 0
    %170 = vmatprep.subr.bf16.mxu0 0
    %171 = vmatpush1.bf16.msra.mxu0 0
    %172 = vmatprep.mubr.bf16.mxu0 0
    %173 = vmatmul.mubr.bf16.gmra.mrb[0].mxu0 %v67
    %v174 = vpop.f32.mrb[0].mxu0
    %v175 = vadd.f32 %v90, %v174
    %v176 = vpop.f32.mrb[0].mxu0
    %v177 = vpop.f32.mrb[0].mxu0
    %v178 = vadd.f32 %v90, %v177
    %v179 = vpop.f32.mrb[0].mxu0
    %180 = vmatprep.mubr.bf16.mxu0 0
    %181 = vmatmul.mubr.bf16.gmra.mrb[0].mxu0 %v68
    %v182 = vpop.f32.mrb[0].mxu0
    %v183 = vadd.f32 %v90, %v182
    %v184 = vpop.f32.mrb[0].mxu0
    %v185 = vpop.f32.mrb[0].mxu0
    %v186 = vadd.f32 %v90, %v185
    %v187 = vpop.f32.mrb[0].mxu0
    %188 = vdwg.mxu0
    %v189 = vmul.f32 %v175, 0.70710677
    %v190 = vmul.f32 %v178, 0.70710677
    %v191 = vmul.f32 %v183, 0.70710677
    %v192 = vmul.f32 %v186, 0.70710677
    %v193 = vand.u32 2147483647, %v189
    %v194 = vand.u32 2147483647, %v190
    %v195 = vand.u32 2147483647, %v191
    %v196 = vand.u32 2147483647, %v192
    %v197 = vmul.f32 %v193, 0.3275911
    %v198 = vmul.f32 %v194, 0.3275911
    %v199 = vmul.f32 %v195, 0.3275911
    %v200 = vmul.f32 %v196, 0.3275911
    %v201 = vadd.f32 %v197, 1.0
    %v202 = vadd.f32 %v198, 1.0
    %v203 = vadd.f32 %v199, 1.0
    %v204 = vadd.f32 %v200, 1.0
    %v205 = vrcp.pop %v201
    %v206 = vrcp.pop %v202
    %v207 = vrcp.pop %v203
    %v208 = vrcp.pop %v204
    %v209 = vmul.f32 %v205, 1.0614054
    %v210 = vmul.f32 %v206, 1.0614054
    %v211 = vmul.f32 %v207, 1.0614054
    %v212 = vmul.f32 %v208, 1.0614054
    %v213 = vadd.f32 %v209, -1.4531521
    %v214 = vadd.f32 %v210, -1.4531521
    %v215 = vadd.f32 %v211, -1.4531521
    %v216 = vadd.f32 %v212, -1.4531521
    %v217 = vmul.f32 %v205, %v213
    %v218 = vmul.f32 %v206, %v214
    %v219 = vmul.f32 %v207, %v215
    %v220 = vmul.f32 %v208, %v216
    %v221 = vadd.f32 %v217, 1.4214138
    %v222 = vadd.f32 %v218, 1.4214138
    %v223 = vadd.f32 %v219, 1.4214138
    %v224 = vadd.f32 %v220, 1.4214138
    %v225 = vmul.f32 %v205, %v221
    %v226 = vmul.f32 %v206, %v222
    %v227 = vmul.f32 %v207, %v223
    %v228 = vmul.f32 %v208, %v224
    %v229 = vadd.f32 %v225, -0.28449672
    %v230 = vadd.f32 %v226, -0.28449672
    %v231 = vadd.f32 %v227, -0.28449672
    %v232 = vadd.f32 %v228, -0.28449672
    %v233 = vmul.f32 %v205, %v229
    %v234 = vmul.f32 %v206, %v230
    %v235 = vmul.f32 %v207, %v231
    %v236 = vmul.f32 %v208, %v232
    %v237 = vadd.f32 %v233, 0.2548296
    %v238 = vadd.f32 %v234, 0.2548296
    %v239 = vadd.f32 %v235, 0.2548296
    %v240 = vadd.f32 %v236, 0.2548296
    %v241 = vmul.f32 %v205, %v237
    %v242 = vmul.f32 %v206, %v238
    %v243 = vmul.f32 %v207, %v239
    %v244 = vmul.f32 %v208, %v240
    %v245 = vsub.f32 0.0, %v193
    %v246 = vsub.f32 0.0, %v194
    %v247 = vsub.f32 0.0, %v195
    %v248 = vsub.f32 0.0, %v196
    %v249 = vmul.f32 %v245, %v193
    %v250 = vmul.f32 %v246, %v194
    %v251 = vmul.f32 %v247, %v195
    %v252 = vmul.f32 %v248, %v196
    %v253 = vmul.f32 %v249, 1.442695
    %v254 = vpow.pop %v253
    %v255 = vmul.f32 %v250, 1.442695
    %v256 = vpow.pop %v255
    %v257 = vmul.f32 %v251, 1.442695
    %v258 = vpow.pop %v257
    %v259 = vmul.f32 %v252, 1.442695
    %v260 = vpow.pop %v259
    %v261 = vmul.f32 %v241, %v254
    %v262 = vmul.f32 %v242, %v256
    %v263 = vmul.f32 %v243, %v258
    %v264 = vmul.f32 %v244, %v260
    %v265 = vsub.f32 1.0, %v261
    %v266 = vsub.f32 1.0, %v262
    %v267 = vsub.f32 1.0, %v263
    %v268 = vsub.f32 1.0, %v264
    %vm269 = vcmp.ge.f32.partialorder %v189, 0.0
    %vm270 = vcmp.ge.f32.partialorder %v190, 0.0
    %vm271 = vcmp.ge.f32.partialorder %v191, 0.0
    %vm272 = vcmp.ge.f32.partialorder %v192, 0.0
    %v273 = vsub.f32 0.0, %v265
    %v274 = vsub.f32 0.0, %v266
    %v275 = vsub.f32 0.0, %v267
    %v276 = vsub.f32 0.0, %v268
    %v277 = vsel %vm269, %v265, %v273
    %v278 = vsel %vm270, %v266, %v274
    %v279 = vsel %vm271, %v267, %v275
    %v280 = vsel %vm272, %v268, %v276
    %v281 = vmul.f32 %v175, 0.5
    %v282 = vmul.f32 %v178, 0.5
    %v283 = vmul.f32 %v183, 0.5
    %v284 = vmul.f32 %v186, 0.5
    %v285 = vadd.f32 %v277, 1.0
    %v286 = vadd.f32 %v278, 1.0
    %v287 = vadd.f32 %v279, 1.0
    %v288 = vadd.f32 %v280, 1.0
    %v289 = vmul.f32 %v281, %v285
    %v290 = vmul.f32 %v282, %v286
    %v291 = vmul.f32 %v283, %v287
    %v292 = vmul.f32 %v284, %v288
    %v293 = vpack.c.bf16 %v290, %v289
    %v294 = vpack.c.bf16 %v292, %v291
    %v295 = vld [vmem:[#allocation7] sm:$0xf]
    %v296 = vld [vmem:[#allocation7 + $0x4] sm:$0xf]
    %v297 = vld [vmem:[#allocation7 + $0x8] sm:$0xf]
    %v298 = vld [vmem:[#allocation7 + $0xc] sm:$0xf]
    %v299 = vld [vmem:[#allocation7 + $0x10] sm:$0xf]
    %v300 = vld [vmem:[#allocation7 + $0x14] sm:$0xf]
    %v301 = vld [vmem:[#allocation7 + $0x18] sm:$0xf]
    %v302 = vld [vmem:[#allocation7 + $0x1c] sm:$0xf]
    %v303 = vld [vmem:[#allocation7 + $0x20] sm:$0xf]
    %v304 = vld [vmem:[#allocation7 + $0x24] sm:$0xf]
    %v305 = vld [vmem:[#allocation7 + $0x28] sm:$0xf]
    %v306 = vld [vmem:[#allocation7 + $0x2c] sm:$0xf]
    %v307 = vld [vmem:[#allocation7 + $0x30] sm:$0xf]
    %v308 = vld [vmem:[#allocation7 + $0x34] sm:$0xf]
    %v309 = vld [vmem:[#allocation7 + $0x38] sm:$0xf]
    %v310 = vld [vmem:[#allocation7 + $0x3c] sm:$0xf]
    %v311 = vld [vmem:[%s4] sm:$0x1]
    %v313 = vlaneseq
    %v314 = vshrl.u32 %v313, 7
    %v315 = vsub.s32 0, %v314
    %v316 = vrot.slane %v311, %v315
    %v334 = vunpack.c.l.b16 %v295
    %v335 = vunpack.c.l.b16 %v296
    %v336 = vunpack.c.l.b16 %v297
    %v337 = vunpack.c.l.b16 %v298
    %v338 = vunpack.c.l.b16 %v299
    %v339 = vunpack.c.l.b16 %v300
    %v340 = vunpack.c.l.b16 %v301
    %v341 = vunpack.c.l.b16 %v302
    %v342 = vunpack.c.l.b16 %v303
    %v343 = vunpack.c.l.b16 %v304
    %v344 = vunpack.c.l.b16 %v305
    %v345 = vunpack.c.l.b16 %v306
    %v346 = vunpack.c.l.b16 %v307
    %v347 = vunpack.c.l.b16 %v308
    %v348 = vunpack.c.l.b16 %v309
    %v349 = vunpack.c.l.b16 %v310
    %v350 = vpack.c.b16 %v335, %v334
    %v351 = vpack.c.b16 %v337, %v336
    %v352 = vpack.c.b16 %v339, %v338
    %v353 = vpack.c.b16 %v341, %v340
    %v354 = vpack.c.b16 %v343, %v342
    %v355 = vpack.c.b16 %v345, %v344
    %v356 = vpack.c.b16 %v347, %v346
    %v357 = vpack.c.b16 %v349, %v348
    %366 = vmatprep.subr.bf16.mxu0 0
    %367 = vmatpush1.bf16.msra.mxu0 %v350
    %368 = vmatprep.subr.bf16.mxu0 0
    %369 = vmatpush1.bf16.msra.mxu0 %v351
    %370 = vmatprep.subr.bf16.mxu0 0
    %371 = vmatpush1.bf16.msra.mxu0 %v352
    %372 = vmatprep.subr.bf16.mxu0 0
    %373 = vmatpush1.bf16.msra.mxu0 %v353
    %374 = vmatprep.subr.bf16.mxu0 0
    %375 = vmatpush1.bf16.msra.mxu0 %v354
    %376 = vmatprep.subr.bf16.mxu0 0
    %377 = vmatpush1.bf16.msra.mxu0 %v355
    %378 = vmatprep.subr.bf16.mxu0 0
    %379 = vmatpush1.bf16.msra.mxu0 %v356
    %380 = vmatprep.subr.bf16.mxu0 0
    %381 = vmatpush1.bf16.msra.mxu0 %v357
    %382 = vmatprep.subr.bf16.mxu0 0
    %383 = vmatpush1.bf16.msra.mxu0 0
    %384 = vmatprep.subr.bf16.mxu0 0
    %385 = vmatpush1.bf16.msra.mxu0 0
    %386 = vmatprep.subr.bf16.mxu0 0
    %387 = vmatpush1.bf16.msra.mxu0 0
    %388 = vmatprep.subr.bf16.mxu0 0
    %389 = vmatpush1.bf16.msra.mxu0 0
    %390 = vmatprep.subr.bf16.mxu0 0
    %391 = vmatpush1.bf16.msra.mxu0 0
    %392 = vmatprep.subr.bf16.mxu0 0
    %393 = vmatpush1.bf16.msra.mxu0 0
    %394 = vmatprep.subr.bf16.mxu0 0
    %395 = vmatpush1.bf16.msra.mxu0 0
    %396 = vmatprep.subr.bf16.mxu0 0
    %397 = vmatpush1.bf16.msra.mxu0 0
    %398 = vmatprep.mubr.bf16.mxu0 0
    %399 = vmatmul.mubr.bf16.gmra.mrb[0].mxu0 %v293
    %v400 = vpop.f32.mrb[0].mxu0
    %v401 = vadd.f32 %v316, %v400
    %v402 = vpop.f32.mrb[0].mxu0
    %v403 = vpop.f32.mrb[0].mxu0
    %v404 = vadd.f32 %v316, %v403
    %v405 = vpop.f32.mrb[0].mxu0
    %406 = vmatprep.mubr.bf16.mxu0 0
    %407 = vmatmul.mubr.bf16.gmra.mrb[0].mxu0 %v294
    %v408 = vpop.f32.mrb[0].mxu0
    %v409 = vadd.f32 %v316, %v408
    %v410 = vpop.f32.mrb[0].mxu0
    %v411 = vpop.f32.mrb[0].mxu0
    %v412 = vadd.f32 %v316, %v411
    %v413 = vpop.f32.mrb[0].mxu0
    %414 = vdwg.mxu0
    %415 = vst [vmem:[#allocation8] sm:$0xff] %v401
    %416 = vst [vmem:[#allocation8 + $0x8] sm:$0xff] %v404
    %417 = vst [vmem:[#allocation8 + $0x10] sm:$0xff] %v409
    %418 = vst [vmem:[#allocation8 + $0x18] sm:$0xff] %v412
    // Predicated region
    $region34: #{tpu_custom_call.1} parent=1 // pred_check
      _
    $region35: #{tpu_custom_call.1} parent=1 // pred_check_branch
      %420 = sbr.rel (0) target = $region37
    $region36: #{tpu_custom_call.1} parent=1 // pred_region
      %s422 = ssub.s32 512, 512
      %423 = vsyncadd [#allocation4], %s422
      %s424 = sshll.u32 [#allocation8], 4
      %s425 = int_to_ptr.vmem [resolvable:$true] %s424
      %430 = dma.vmem_to_hbm [thread:$0]  %s425, 512, %s5, [#allocation4], 128, 128, 8
    $region37: #{tpu_custom_call.1} parent=1 // pred_fallthru
      _
    // Predicated region
    $region38: #{tpu_custom_call.1} parent=1 // pred_check
      _
    $region39: #{tpu_custom_call.1} parent=1 // pred_check_branch
      %432 = sbr.rel (0) target = $region41
    $region40: #{tpu_custom_call.1} parent=1 // pred_region
      %433 = dma.done [#allocation4], 512
    $region41: #{tpu_custom_call.1} parent=1 // pred_fallthru
      _
    %434 = vsyncpa [#allocation3], 1
    %435 = vsyncpa [#allocation6], 1
    %436 = vsyncpa [#allocation4], 1

</llo_original>
